<compile_context>
chip_gen: v7x
topology: tpu7x:2x2x1
jax: 0.10.0
libtpu: 0.0.40
codegen_flags: <defaults>
</compile_context>

<pallas_src>
import functools

import jax
import jax.numpy as jnp
from jax import lax
from jax.experimental import pallas as pl
from jax.experimental.pallas import tpu as pltpu


def _round_up(n, m):
    return ((n + m - 1) // m) * m


def _critic_kernel(state_ref, action_ref, w1s_ref, w1a_ref, b1_ref,
                   w2_ref, b2_ref, w3_ref, b3_ref, o_ref):
    """One batch tile: (concat-fused) fc1 -> ReLU -> fc2 -> ReLU -> fc3."""
    s = state_ref[...].astype(jnp.bfloat16)                       # [TB, S]
    a = action_ref[...].astype(jnp.bfloat16)                      # [TB, A]

    # fc1: torch.cat((state, action), dim=1) @ W1 fused as two bf16 matmuls
    # summed in f32.
    h1 = (jnp.dot(s, w1s_ref[...], preferred_element_type=jnp.float32)
          + jnp.dot(a, w1a_ref[...], preferred_element_type=jnp.float32)
          + b1_ref[...])
    h1 = jnp.maximum(h1, 0.0)                                     # [TB, H] f32

    # fc2
    h2 = (jnp.dot(h1.astype(jnp.bfloat16), w2_ref[...],
                  preferred_element_type=jnp.float32) + b2_ref[...])
    h2 = jnp.maximum(h2, 0.0)                                     # [TB, H] f32

    # fc3 (out_features == 1): contract H between w3 [1, H] and h2 [TB, H],
    # producing a lane-dense [1, TB] row (batch on lanes) stored unmasked.
    q = lax.dot_general(w3_ref[...], h2,
                        dimension_numbers=(((1,), (1,)), ((), ())),
                        preferred_element_type=jnp.float32)       # [1, TB]
    o_ref[...] = (q + b3_ref[0, 0]).astype(o_ref.dtype)


@functools.partial(jax.jit, static_argnames=("block_b",))
def critic_forward(state, action, params, *, block_b=1024):
    """Q(s, a) for a batch. state: [B, S], action: [B, A] -> [B, 1] f32."""
    w1s, w1a, b1, w2, b2, w3, b3 = params
    B, S = state.shape
    A = action.shape[1]
    H = w2.shape[0]

    # Batch tile size.
    if B < 128:
        # Single grid step; every block equals the full array, so the (8,128)
        # divisibility rule is satisfied without padding.
        TB = B
    else:
        TB = min(_round_up(max(block_b, 128), 128), (B // 128) * 128)
        if B >= 256:
            # Keep >= 2 grid steps so v7x's two TensorCores both get work.
            TB = min(TB, _round_up(pl.cdiv(B, 2), 128))
    steps = pl.cdiv(B, TB)
    Bp = steps * TB          # padded *output* width only (few KB), sliced back

    flops = 2 * B * ((S + A) * H + H * H + H)
    bytes_accessed = (B * (S + A) + Bp) * 4 + sum(
        int(p.size) * p.dtype.itemsize for p in params)
    # Scoped-VMEM headroom: [TB,S]/[TB,A] f32 tiles lane-pad to 128 and are
    # double-buffered; add slack for resident weights / spilled activations.
    vmem_limit = int(min(64 << 20, max(32 << 20, 12 * TB * 128 * 4)))

    out = pl.pallas_call(
        _critic_kernel,
        out_shape=jax.ShapeDtypeStruct((1, Bp), jnp.float32),
        grid=(steps,),
        in_specs=[
            pl.BlockSpec((TB, S), lambda i: (i, 0)),             # state tile
            pl.BlockSpec((TB, A), lambda i: (i, 0)),             # action tile
            pl.BlockSpec((S, H), lambda i: (0, 0)),              # w1_s (resident)
            pl.BlockSpec((A, H), lambda i: (0, 0)),              # w1_a (resident)
            pl.BlockSpec((1, H), lambda i: (0, 0)),              # b1
            pl.BlockSpec((H, H), lambda i: (0, 0)),              # w2
            pl.BlockSpec((1, H), lambda i: (0, 0)),              # b2
            pl.BlockSpec((1, H), lambda i: (0, 0)),              # w3 row
            pl.BlockSpec(memory_space=pltpu.MemorySpace.SMEM),   # b3 scalar
        ],
        out_specs=pl.BlockSpec((1, TB), lambda i: (0, i)),       # lane-dense
        compiler_params=pltpu.CompilerParams(
            dimension_semantics=("parallel",),
            vmem_limit_bytes=vmem_limit),
        cost_estimate=pl.CostEstimate(
            flops=flops, transcendentals=0, bytes_accessed=bytes_accessed),
    )(state, action, w1s, w1a, b1, w2, b2, w3, b3)

    return out[0, :B].reshape(B, 1)


def init_critic_params(key, state_size, action_size, hidden_size=32):
    """Deterministic init mirroring Critic.reset_parameters / nn.Linear defaults.

    PyTorch's hidden_init uses weight.size()[0] == out_features as fan_in, so
    lim = 1/sqrt(hidden_size) for fc1/fc2 weights; fc3 weight ~ U(-3e-3, 3e-3).
    Biases keep nn.Linear's default U(-1/sqrt(in_features), 1/sqrt(in_features)).
    Weights are [in, out] (transposed from PyTorch); fc1's weight is split into
    state/action halves in the same order as torch.cat((state, action), dim=1).
    fc1/fc2 matmul weights are stored in bf16 (f32 accumulation in the kernel).
    """
    in1 = state_size + action_size
    ks = jax.random.split(key, 6)

    lim12 = 1.0 / jnp.sqrt(jnp.float32(hidden_size))
    w1 = jax.random.uniform(ks[0], (in1, hidden_size), jnp.float32, -lim12, lim12)
    b1 = jax.random.uniform(ks[1], (1, hidden_size), jnp.float32,
                            -1.0 / jnp.sqrt(jnp.float32(in1)),
                            1.0 / jnp.sqrt(jnp.float32(in1)))
    w2 = jax.random.uniform(ks[2], (hidden_size, hidden_size), jnp.float32, -lim12, lim12)
    b2 = jax.random.uniform(ks[3], (1, hidden_size), jnp.float32,
                            -1.0 / jnp.sqrt(jnp.float32(hidden_size)),
                            1.0 / jnp.sqrt(jnp.float32(hidden_size)))
    w3 = jax.random.uniform(ks[4], (1, hidden_size), jnp.float32, -3e-3, 3e-3)
    b3 = jax.random.uniform(ks[5], (1, 1), jnp.float32,
                            -1.0 / jnp.sqrt(jnp.float32(hidden_size)),
                            1.0 / jnp.sqrt(jnp.float32(hidden_size)))

    w1_s = w1[:state_size].astype(jnp.bfloat16)   # [S, H]
    w1_a = w1[state_size:].astype(jnp.bfloat16)   # [A, H]
    w2 = w2.astype(jnp.bfloat16)                  # [H, H]
    return (w1_s, w1_a, b1, w2, b2, w3, b3)


def _reference_forward(state, action, params):
    """Pure-JAX reference mirroring the kernel's bf16-in / f32-accumulate math."""
    w1s, w1a, b1, w2, b2, w3, b3 = params
    s = state.astype(jnp.bfloat16)
    a = action.astype(jnp.bfloat16)
    h1 = jnp.maximum(
        jnp.dot(s, w1s, preferred_element_type=jnp.float32)
        + jnp.dot(a, w1a, preferred_element_type=jnp.float32) + b1, 0.0)
    h2 = jnp.maximum(
        jnp.dot(h1.astype(jnp.bfloat16), w2,
                preferred_element_type=jnp.float32) + b2, 0.0)
    return h2 @ w3.T + b3


def _reference_forward_f32(state, action, params):
    """Full-f32 reference of the original PyTorch forward (loose-tolerance sanity check)."""
    w1s, w1a, b1, w2, b2, w3, b3 = params
    w1 = jnp.concatenate([w1s, w1a], axis=0).astype(jnp.float32)
    x = jnp.concatenate([state, action], axis=1)
    h1 = jnp.maximum(x @ w1 + b1, 0.0)
    h2 = jnp.maximum(h1 @ w2.astype(jnp.float32) + b2, 0.0)
    return h2 @ w3.T + b3


if __name__ == "__main__":
    # Small shapes consistent with the module: batch=8, state=16, action=4, hidden=32.
    batch, state_size, action_size, hidden_size = 8, 16, 4, 32

    key = jax.random.PRNGKey(0)
    k_param, k_state, k_action = jax.random.split(key, 3)

    params = init_critic_params(k_param, state_size, action_size, hidden_size)
    state = jax.random.normal(k_state, (batch, state_size), jnp.float32)
    action = jax.random.normal(k_action, (batch, action_size), jnp.float32)

    q = jax.block_until_ready(critic_forward(state, action, params))
    q_ref = _reference_forward(state, action, params)
    q_f32 = _reference_forward_f32(state, action, params)
    assert q.shape == (batch, 1)
    assert jnp.allclose(q, q_ref, atol=1e-4, rtol=1e-4), "mismatch vs bf16 reference"
    assert jnp.allclose(q, q_f32, atol=5e-3, rtol=5e-3), "mismatch vs f32 reference"

    # Multi-step grid + ragged batch: partial last input block, padded
    # lane-dense output sliced back to B.
    batch2 = 200
    k_s2, k_a2 = jax.random.split(jax.random.PRNGKey(1))
    state2 = jax.random.normal(k_s2, (batch2, state_size), jnp.float32)
    action2 = jax.random.normal(k_a2, (batch2, action_size), jnp.float32)
    q2 = jax.block_until_ready(critic_forward(state2, action2, params, block_b=128))
    q2_ref = _reference_forward(state2, action2, params)
    assert q2.shape == (batch2, 1)
    assert jnp.allclose(q2, q2_ref, atol=1e-4, rtol=1e-4), "mismatch vs reference (tiled)"

    # Default block_b path with >= 2 grid steps (v7x two-TensorCore split).
    batch3 = 600
    k_s3, k_a3 = jax.random.split(jax.random.PRNGKey(2))
    state3 = jax.random.normal(k_s3, (batch3, state_size), jnp.float32)
    action3 = jax.random.normal(k_a3, (batch3, action_size), jnp.float32)
    q3 = jax.block_until_ready(critic_forward(state3, action3, params))
    q3_ref = _reference_forward(state3, action3, params)
    assert q3.shape == (batch3, 1)
    assert jnp.allclose(q3, q3_ref, atol=1e-4, rtol=1e-4), "mismatch vs reference (default tiles)"

    # TODO(synk): for SAC twin critics, stack Q1/Q2 weights and emit a (2, Bp)
    # lane-dense output from one pallas_call (halves launch overhead and reads
    # state/action from HBM once); omitted here to preserve the single-Critic
    # module interface.
    print("KERNEL_OK")
</pallas_src>

<mosaic_0001>
module attributes {stable_mosaic.version = 11 : i64} {
  func.func @_critic_kernel(%arg0: i32, %arg1: memref<8x16xf32, #tpu.memory_space<vmem>>, %arg2: memref<8x4xf32, #tpu.memory_space<vmem>>, %arg3: memref<16x32xbf16, #tpu.memory_space<vmem>>, %arg4: memref<4x32xbf16, #tpu.memory_space<vmem>>, %arg5: memref<1x32xf32, #tpu.memory_space<vmem>>, %arg6: memref<32x32xbf16, #tpu.memory_space<vmem>>, %arg7: memref<1x32xf32, #tpu.memory_space<vmem>>, %arg8: memref<1x32xf32, #tpu.memory_space<vmem>>, %arg9: memref<1x1xf32, #tpu.memory_space<smem>>, %arg10: memref<1x8xf32, #tpu.memory_space<vmem>>) attributes {dimension_semantics = [#tpu.dimension_semantics<parallel>], iteration_bounds = array<i64: 1>, scalar_prefetch = 0 : i64, scratch_operands = 0 : i64, tpu.core_type = #tpu.core_type<tc>, window_params = [{transform_indices = @transform_0, window_bounds = array<i64: 8, 16>}, {transform_indices = @transform_1, window_bounds = array<i64: 8, 4>}, {pipeline_mode = #tpu.pipeline_mode<synchronous>, transform_indices = @transform_2, window_bounds = array<i64: 16, 32>}, {pipeline_mode = #tpu.pipeline_mode<synchronous>, transform_indices = @transform_3, window_bounds = array<i64: 4, 32>}, {pipeline_mode = #tpu.pipeline_mode<synchronous>, transform_indices = @transform_4, window_bounds = array<i64: 1, 32>}, {pipeline_mode = #tpu.pipeline_mode<synchronous>, transform_indices = @transform_5, window_bounds = array<i64: 32, 32>}, {pipeline_mode = #tpu.pipeline_mode<synchronous>, transform_indices = @transform_6, window_bounds = array<i64: 1, 32>}, {pipeline_mode = #tpu.pipeline_mode<synchronous>, transform_indices = @transform_7, window_bounds = array<i64: 1, 32>}, {transform_indices = @transform_8, window_bounds = array<i64: 1, 1>}, {transform_indices = @transform_9, window_bounds = array<i64: 1, 8>}]} {
    %c0 = arith.constant 0 : index
    %c0_0 = arith.constant 0 : index
    %0 = vector.load %arg1[%c0, %c0_0] : memref<8x16xf32, #tpu.memory_space<vmem>>, vector<8x16xf32>
    %1 = arith.truncf %0 : vector<8x16xf32> to vector<8x16xbf16>
    %c0_1 = arith.constant 0 : index
    %c0_2 = arith.constant 0 : index
    %2 = vector.load %arg2[%c0_1, %c0_2] : memref<8x4xf32, #tpu.memory_space<vmem>>, vector<8x4xf32>
    %3 = arith.truncf %2 : vector<8x4xf32> to vector<8x4xbf16>
    %c0_3 = arith.constant 0 : index
    %c0_4 = arith.constant 0 : index
    %4 = vector.load %arg3[%c0_3, %c0_4] : memref<16x32xbf16, #tpu.memory_space<vmem>>, vector<16x32xbf16>
    %cst = arith.constant dense<0.000000e+00> : vector<8x32xf32>
    %5 = tpu.matmul %1, %4, %cst {dimension_numbers = #tpu.dot_dimension_numbers<[1], [0], [0], [1], [0, 0, 1, 1], [], []>} : vector<8x16xbf16>, vector<16x32xbf16>, vector<8x32xf32> -> vector<8x32xf32>
    %c0_5 = arith.constant 0 : index
    %c0_6 = arith.constant 0 : index
    %6 = vector.load %arg4[%c0_5, %c0_6] : memref<4x32xbf16, #tpu.memory_space<vmem>>, vector<4x32xbf16>
    %cst_7 = arith.constant dense<0.000000e+00> : vector<8x32xf32>
    %7 = tpu.matmul %3, %6, %cst_7 {dimension_numbers = #tpu.dot_dimension_numbers<[1], [0], [0], [1], [0, 0, 1, 1], [], []>} : vector<8x4xbf16>, vector<4x32xbf16>, vector<8x32xf32> -> vector<8x32xf32>
    %8 = arith.addf %5, %7 : vector<8x32xf32>
    %c0_8 = arith.constant 0 : index
    %c0_9 = arith.constant 0 : index
    %9 = vector.load %arg5[%c0_8, %c0_9] : memref<1x32xf32, #tpu.memory_space<vmem>>, vector<1x32xf32>
    %10 = vector.broadcast %9 : vector<1x32xf32> to vector<8x32xf32>
    %11 = arith.addf %8, %10 : vector<8x32xf32>
    %cst_10 = arith.constant 0.000000e+00 : f32
    %12 = vector.broadcast %cst_10 : f32 to vector<8x32xf32>
    %13 = arith.maximumf %11, %12 : vector<8x32xf32>
    %14 = arith.truncf %13 : vector<8x32xf32> to vector<8x32xbf16>
    %c0_11 = arith.constant 0 : index
    %c0_12 = arith.constant 0 : index
    %15 = vector.load %arg6[%c0_11, %c0_12] : memref<32x32xbf16, #tpu.memory_space<vmem>>, vector<32x32xbf16>
    %cst_13 = arith.constant dense<0.000000e+00> : vector<8x32xf32>
    %16 = tpu.matmul %14, %15, %cst_13 {dimension_numbers = #tpu.dot_dimension_numbers<[1], [0], [0], [1], [0, 0, 1, 1], [], []>} : vector<8x32xbf16>, vector<32x32xbf16>, vector<8x32xf32> -> vector<8x32xf32>
    %c0_14 = arith.constant 0 : index
    %c0_15 = arith.constant 0 : index
    %17 = vector.load %arg7[%c0_14, %c0_15] : memref<1x32xf32, #tpu.memory_space<vmem>>, vector<1x32xf32>
    %18 = vector.broadcast %17 : vector<1x32xf32> to vector<8x32xf32>
    %19 = arith.addf %16, %18 : vector<8x32xf32>
    %cst_16 = arith.constant 0.000000e+00 : f32
    %20 = vector.broadcast %cst_16 : f32 to vector<8x32xf32>
    %21 = arith.maximumf %19, %20 : vector<8x32xf32>
    %c0_17 = arith.constant 0 : index
    %c0_18 = arith.constant 0 : index
    %22 = vector.load %arg8[%c0_17, %c0_18] : memref<1x32xf32, #tpu.memory_space<vmem>>, vector<1x32xf32>
    %cst_19 = arith.constant dense<0.000000e+00> : vector<1x8xf32>
    %23 = tpu.matmul %22, %21, %cst_19 {dimension_numbers = #tpu.dot_dimension_numbers<[1], [1], [0], [0], [0, 0, 1, 0], [], []>} : vector<1x32xf32>, vector<8x32xf32>, vector<1x8xf32> -> vector<1x8xf32>
    %c0_20 = arith.constant 0 : index
    %c0_21 = arith.constant 0 : index
    %24 = memref.load %arg9[%c0_20, %c0_21] : memref<1x1xf32, #tpu.memory_space<smem>>
    %25 = vector.broadcast %24 : f32 to vector<1x8xf32>
    %26 = arith.addf %23, %25 : vector<1x8xf32>
    %c0_22 = arith.constant 0 : index
    %c0_23 = arith.constant 0 : index
    %27 = vector.load %arg10[%c0_22, %c0_23] : memref<1x8xf32, #tpu.memory_space<vmem>>, vector<1x8xf32>
    tpu.vector_store %arg10[%c0_22, %c0_23], %26 {strides = array<i32>} : memref<1x8xf32, #tpu.memory_space<vmem>>, vector<1x8xf32>,
    return
  }
  func.func @transform_0(%arg0: i32) -> (i32, i32) {
    %c0_i32 = arith.constant 0 : i32
    %c0_i32_0 = arith.constant 0 : i32
    return %arg0, %c0_i32 : i32, i32
  }
  func.func @transform_1(%arg0: i32) -> (i32, i32) {
    %c0_i32 = arith.constant 0 : i32
    %c0_i32_0 = arith.constant 0 : i32
    return %arg0, %c0_i32 : i32, i32
  }
  func.func @transform_2(%arg0: i32) -> (i32, i32) {
    %c0_i32 = arith.constant 0 : i32
    %c0_i32_0 = arith.constant 0 : i32
    %c0_i32_1 = arith.constant 0 : i32
    return %c0_i32, %c0_i32_0 : i32, i32
  }
  func.func @transform_3(%arg0: i32) -> (i32, i32) {
    %c0_i32 = arith.constant 0 : i32
    %c0_i32_0 = arith.constant 0 : i32
    %c0_i32_1 = arith.constant 0 : i32
    return %c0_i32, %c0_i32_0 : i32, i32
  }
  func.func @transform_4(%arg0: i32) -> (i32, i32) {
    %c0_i32 = arith.constant 0 : i32
    %c0_i32_0 = arith.constant 0 : i32
    %c0_i32_1 = arith.constant 0 : i32
    return %c0_i32, %c0_i32_0 : i32, i32
  }
  func.func @transform_5(%arg0: i32) -> (i32, i32) {
    %c0_i32 = arith.constant 0 : i32
    %c0_i32_0 = arith.constant 0 : i32
    %c0_i32_1 = arith.constant 0 : i32
    return %c0_i32, %c0_i32_0 : i32, i32
  }
  func.func @transform_6(%arg0: i32) -> (i32, i32) {
    %c0_i32 = arith.constant 0 : i32
    %c0_i32_0 = arith.constant 0 : i32
    %c0_i32_1 = arith.constant 0 : i32
    return %c0_i32, %c0_i32_0 : i32, i32
  }
  func.func @transform_7(%arg0: i32) -> (i32, i32) {
    %c0_i32 = arith.constant 0 : i32
    %c0_i32_0 = arith.constant 0 : i32
    %c0_i32_1 = arith.constant 0 : i32
    return %c0_i32, %c0_i32_0 : i32, i32
  }
  func.func @transform_8(%arg0: i32) -> (i32, i32) {
    %c0_i32 = arith.constant 0 : i32
    %c0_i32_0 = arith.constant 0 : i32
    %c0_i32_1 = arith.constant 0 : i32
    return %c0_i32, %c0_i32_0 : i32, i32
  }
  func.func @transform_9(%arg0: i32) -> (i32, i32) {
    %c0_i32 = arith.constant 0 : i32
    %c0_i32_0 = arith.constant 0 : i32
    return %c0_i32, %arg0 : i32, i32
  }
}

</mosaic_0001>

<llo_original>
// kernel: critic_forward.1
$region0: #{critic_forward.1}
  #allocation0 [shape = 'u32[]', space=smem, size = 0x4, offset = 0x4, fixed_abs, tag = 'smem constant byte address 0x4 - core index']
  #allocation1 [shape = 'u32[144,128]{1,0:T(1,128)}', space=vmem, size = 0x12000, scoped, tag = 'internal scratch']
  #allocation2 [shape = 'f32[1,1]{1,0:T(1,128)S(6)}', space=smem, size = 0x200, scoped, tag = 'scoped memory for critic_forward.1']
  %s0 = inlined_call_operand.vmem [shape: f32[8,16], index: 0, kind: input, shape index: {}]
  %s1 = inlined_call_operand.vmem [shape: f32[8,4], index: 1, kind: input, shape index: {}]
  %s2 = inlined_call_operand.hbm [shape: bf16[16,32], index: 2, kind: input, shape index: {}]
  %s3 = inlined_call_operand.vmem [shape: bf16[4,32], index: 3, kind: input, shape index: {}]
  %s4 = inlined_call_operand.vmem [shape: f32[1,32], index: 4, kind: input, shape index: {}]
  %s5 = inlined_call_operand.vmem [shape: bf16[32,32], index: 5, kind: input, shape index: {}]
  %s6 = inlined_call_operand.vmem [shape: f32[1,32], index: 6, kind: input, shape index: {}]
  %s7 = inlined_call_operand.vmem [shape: f32[1,32], index: 7, kind: input, shape index: {}]
  %s8 = inlined_call_operand.<no memory space> [shape: f32[1,1], index: 8, kind: input, shape index: {}]
  %s9 = inlined_call_operand.hbm [shape: f32[1,8], index: 9, kind: output, shape index: {}]
  %s10 = sld [smem:[#allocation0]]
  $region50: #{critic_forward.1} parent=0
    _
  %s12 = ssub.s32 1, %s10
  %s13 = scalar_select 0, %s12, %s10
  %14 = sst [smem:[#allocation2]] %s8
  $region1: #{critic_forward.1} parent=0
    #allocation3 [shape = 'u8[4096]{0}', space=vmem, size = 0x1000, scoped, tag = 'input window, operand 2, single buffered']
    #allocation4 [shape = 's32[1]{0}', space=sflag, size = 0x4, scoped, tag = 'scoped memory for critic_forward.1']
    #allocation5 [shape = 's32[1]{0}', space=sflag, size = 0x4, scoped, tag = 'scoped memory for critic_forward.1']
    #allocation6 [shape = 'u8[512]{0}', space=vmem, size = 0x400, scoped, tag = 'output window, operand 0, single buffered']
    %15 = vsyncpa [#allocation4], 0
    %16 = vsyncpa [#allocation5], 0
    // Predicated region
    $region2: #{critic_forward.1} parent=1 // pred_check
      _
    $region3: #{critic_forward.1} parent=1 // pred_check_branch
      %18 = sbr.rel (0) target = $region5
    $region4: #{critic_forward.1} parent=1 // pred_region
      _
    $region5: #{critic_forward.1} parent=1 // pred_fallthru
      _
    // Predicated region
    $region6: #{critic_forward.1} parent=1 // pred_check
      _
    $region7: #{critic_forward.1} parent=1 // pred_check_branch
      %20 = sbr.rel (0) target = $region9
    $region8: #{critic_forward.1} parent=1 // pred_region
      _
    $region9: #{critic_forward.1} parent=1 // pred_fallthru
      _
    // Predicated region
    $region10: #{critic_forward.1} parent=1 // pred_check
      _
    $region11: #{critic_forward.1} parent=1 // pred_check_branch
      %22 = sbr.rel (0) target = $region13
    $region12: #{critic_forward.1} parent=1 // pred_region
      %s24 = ssub.s32 128, 128
      %25 = vsyncadd [#allocation4], %s24
      %s26 = sshll.u32 [#allocation3], 4
      %s27 = int_to_ptr.vmem [resolvable:$true] %s26
      %32 = dma.hbm_to_vmem [thread:$0]  %s2, 128, %s27, [#allocation4], 64, 64, 4
    $region13: #{critic_forward.1} parent=1 // pred_fallthru
      _
    // Predicated region
    $region14: #{critic_forward.1} parent=1 // pred_check
      _
    $region15: #{critic_forward.1} parent=1 // pred_check_branch
      %34 = sbr.rel (0) target = $region17
    $region16: #{critic_forward.1} parent=1 // pred_region
      _
    $region17: #{critic_forward.1} parent=1 // pred_fallthru
      _
    // Predicated region
    $region18: #{critic_forward.1} parent=1 // pred_check
      _
    $region19: #{critic_forward.1} parent=1 // pred_check_branch
      %36 = sbr.rel (0) target = $region21
    $region20: #{critic_forward.1} parent=1 // pred_region
      _
    $region21: #{critic_forward.1} parent=1 // pred_fallthru
      _
    // Predicated region
    $region22: #{critic_forward.1} parent=1 // pred_check
      _
    $region23: #{critic_forward.1} parent=1 // pred_check_branch
      %38 = sbr.rel (0) target = $region25
    $region24: #{critic_forward.1} parent=1 // pred_region
      _
    $region25: #{critic_forward.1} parent=1 // pred_fallthru
      _
    // Predicated region
    $region26: #{critic_forward.1} parent=1 // pred_check
      _
    $region27: #{critic_forward.1} parent=1 // pred_check_branch
      %40 = sbr.rel (0) target = $region29
    $region28: #{critic_forward.1} parent=1 // pred_region
      _
    $region29: #{critic_forward.1} parent=1 // pred_fallthru
      _
    // Predicated region
    $region30: #{critic_forward.1} parent=1 // pred_check
      _
    $region31: #{critic_forward.1} parent=1 // pred_check_branch
      %42 = sbr.rel (0) target = $region33
    $region32: #{critic_forward.1} parent=1 // pred_region
      _
    $region33: #{critic_forward.1} parent=1 // pred_fallthru
      _
    // Predicated region
    $region34: #{critic_forward.1} parent=1 // pred_check
      _
    $region35: #{critic_forward.1} parent=1 // pred_check_branch
      %44 = sbr.rel (0) target = $region37
    $region36: #{critic_forward.1} parent=1 // pred_region
      _
    $region37: #{critic_forward.1} parent=1 // pred_fallthru
      _
    // Predicated region
    $region38: #{critic_forward.1} parent=1 // pred_check
      _
    $region39: #{critic_forward.1} parent=1 // pred_check_branch
      %46 = sbr.rel (0) target = $region41
    $region40: #{critic_forward.1} parent=1 // pred_region
      %47 = dma.done [#allocation4], 128
    $region41: #{critic_forward.1} parent=1 // pred_fallthru
      _
    %v49 = vld [vmem:[%s0] sm:$0xff]
    %v50 = vpack.c.bf16 %v49, %v49
    %v51 = vld [vmem:[%s1] sm:$0xff]
    %v52 = vpack.c.bf16 %v51, %v51
    %v53 = vld [vmem:[#allocation3] sm:$0xf]
    %v54 = vld [vmem:[#allocation3 + $0x4] sm:$0xf]
    %v55 = vld [vmem:[%s3] sm:$0x3]
    %vm56 = vcmask 31744
    %v58 = vsel %vm56, %v52, 0
    %vm60 = vcmask 1041408
    %v62 = vsel %vm60, %v55, 0
    %64 = vmatprep.subr.bf16.mxu0 0
    %65 = vmatpush1.bf16.msra.mxu0 %v62
    %66 = vmatprep.subr.bf16.mxu0 0
    %67 = vmatpush1.bf16.msra.mxu0 0
    %68 = vmatprep.subr.bf16.mxu0 0
    %69 = vmatpush1.bf16.msra.mxu0 0
    %70 = vmatprep.subr.bf16.mxu0 0
    %71 = vmatpush1.bf16.msra.mxu0 0
    %72 = vmatprep.subr.bf16.mxu0 0
    %73 = vmatpush1.bf16.msra.mxu0 0
    %74 = vmatprep.subr.bf16.mxu0 0
    %75 = vmatpush1.bf16.msra.mxu0 0
    %76 = vmatprep.subr.bf16.mxu0 0
    %77 = vmatpush1.bf16.msra.mxu0 0
    %78 = vmatprep.subr.bf16.mxu0 0
    %79 = vmatpush1.bf16.msra.mxu0 0
    %80 = vmatprep.subr.bf16.mxu0 0
    %81 = vmatpush1.bf16.msra.mxu0 0
    %82 = vmatprep.subr.bf16.mxu0 0
    %83 = vmatpush1.bf16.msra.mxu0 0
    %84 = vmatprep.subr.bf16.mxu0 0
    %85 = vmatpush1.bf16.msra.mxu0 0
    %86 = vmatprep.subr.bf16.mxu0 0
    %87 = vmatpush1.bf16.msra.mxu0 0
    %88 = vmatprep.subr.bf16.mxu0 0
    %89 = vmatpush1.bf16.msra.mxu0 0
    %90 = vmatprep.subr.bf16.mxu0 0
    %91 = vmatpush1.bf16.msra.mxu0 0
    %92 = vmatprep.subr.bf16.mxu0 0
    %93 = vmatpush1.bf16.msra.mxu0 0
    %94 = vmatprep.subr.bf16.mxu0 0
    %95 = vmatpush1.bf16.msra.mxu0 0
    %96 = vmatprep.mubr.bf16.mxu0 0
    %97 = vmatmul.mubr.bf16.gmra.mrb[0].mxu0 %v58
    %v98 = vpop.f32.mrb[0].mxu0
    %v99 = vadd.f32 0.0, %v98
    %v100 = vpop.f32.mrb[0].mxu0
    %v101 = vpop.f32.mrb[0].mxu0
    %v102 = vpop.f32.mrb[0].mxu0
    %103 = vdwg.mxu0
    %v106 = vunpack.c.l.b16 %v53
    %v107 = vunpack.c.l.b16 %v54
    %v108 = vpack.c.b16 %v107, %v106
    %vm110 = vcmask 130048
    %v112 = vsel %vm110, %v50, 0
    %114 = vmatprep.subr.bf16.mxu0 0
    %115 = vmatpush1.bf16.msra.mxu0 %v108
    %116 = vmatprep.subr.bf16.mxu0 0
    %117 = vmatpush1.bf16.msra.mxu0 0
    %118 = vmatprep.subr.bf16.mxu0 0
    %119 = vmatpush1.bf16.msra.mxu0 0
    %120 = vmatprep.subr.bf16.mxu0 0
    %121 = vmatpush1.bf16.msra.mxu0 0
    %122 = vmatprep.subr.bf16.mxu0 0
    %123 = vmatpush1.bf16.msra.mxu0 0
    %124 = vmatprep.subr.bf16.mxu0 0
    %125 = vmatpush1.bf16.msra.mxu0 0
    %126 = vmatprep.subr.bf16.mxu0 0
    %127 = vmatpush1.bf16.msra.mxu0 0
    %128 = vmatprep.subr.bf16.mxu0 0
    %129 = vmatpush1.bf16.msra.mxu0 0
    %130 = vmatprep.subr.bf16.mxu0 0
    %131 = vmatpush1.bf16.msra.mxu0 0
    %132 = vmatprep.subr.bf16.mxu0 0
    %133 = vmatpush1.bf16.msra.mxu0 0
    %134 = vmatprep.subr.bf16.mxu0 0
    %135 = vmatpush1.bf16.msra.mxu0 0
    %136 = vmatprep.subr.bf16.mxu0 0
    %137 = vmatpush1.bf16.msra.mxu0 0
    %138 = vmatprep.subr.bf16.mxu0 0
    %139 = vmatpush1.bf16.msra.mxu0 0
    %140 = vmatprep.subr.bf16.mxu0 0
    %141 = vmatpush1.bf16.msra.mxu0 0
    %142 = vmatprep.subr.bf16.mxu0 0
    %143 = vmatpush1.bf16.msra.mxu0 0
    %144 = vmatprep.subr.bf16.mxu0 0
    %145 = vmatpush1.bf16.msra.mxu0 0
    %146 = vmatprep.mubr.bf16.mxu0 0
    %147 = vmatmul.mubr.bf16.gmra.mrb[0].mxu0 %v112
    %v148 = vpop.f32.mrb[0].mxu0
    %v149 = vadd.f32 %v99, %v148
    %v150 = vpop.f32.mrb[0].mxu0
    %v151 = vpop.f32.mrb[0].mxu0
    %v152 = vpop.f32.mrb[0].mxu0
    %153 = vdwg.mxu0
    %v154 = vld [vmem:[%s4] sm:$0x1]
    %v156 = vlaneseq
    %v157 = vshrl.u32 %v156, 7
    %v158 = vsub.s32 0, %v157
    %v159 = vrot.slane %v154, %v158
    %v161 = vadd.f32 %v149, %v159
    %v162 = vmax.f32 %v161, 0.0
    %v163 = vpack.c.bf16 %v162, %v162
    %v164 = vld [vmem:[%s5] sm:$0xf]
    %v165 = vld [vmem:[%s5 + $0x4] sm:$0xf]
    %v166 = vld [vmem:[%s5 + $0x8] sm:$0xf]
    %v167 = vld [vmem:[%s5 + $0xc] sm:$0xf]
    %v168 = vld [vmem:[%s6] sm:$0x1]
    %v170 = vlaneseq
    %v171 = vshrl.u32 %v170, 7
    %v172 = vsub.s32 0, %v171
    %v173 = vrot.slane %v168, %v172
    %v179 = vunpack.c.l.b16 %v164
    %v180 = vunpack.c.l.b16 %v165
    %v181 = vunpack.c.l.b16 %v166
    %v182 = vunpack.c.l.b16 %v167
    %v183 = vpack.c.b16 %v180, %v179
    %v184 = vpack.c.b16 %v182, %v181
    %vm187 = vcmask 261120
    %v189 = vsel %vm187, %v163, 0
    %191 = vmatprep.subr.bf16.mxu0 0
    %192 = vmatpush1.bf16.msra.mxu0 %v183
    %193 = vmatprep.subr.bf16.mxu0 0
    %194 = vmatpush1.bf16.msra.mxu0 %v184
    %195 = vmatprep.subr.bf16.mxu0 0
    %196 = vmatpush1.bf16.msra.mxu0 0
    %197 = vmatprep.subr.bf16.mxu0 0
    %198 = vmatpush1.bf16.msra.mxu0 0
    %199 = vmatprep.subr.bf16.mxu0 0
    %200 = vmatpush1.bf16.msra.mxu0 0
    %201 = vmatprep.subr.bf16.mxu0 0
    %202 = vmatpush1.bf16.msra.mxu0 0
    %203 = vmatprep.subr.bf16.mxu0 0
    %204 = vmatpush1.bf16.msra.mxu0 0
    %205 = vmatprep.subr.bf16.mxu0 0
    %206 = vmatpush1.bf16.msra.mxu0 0
    %207 = vmatprep.subr.bf16.mxu0 0
    %208 = vmatpush1.bf16.msra.mxu0 0
    %209 = vmatprep.subr.bf16.mxu0 0
    %210 = vmatpush1.bf16.msra.mxu0 0
    %211 = vmatprep.subr.bf16.mxu0 0
    %212 = vmatpush1.bf16.msra.mxu0 0
    %213 = vmatprep.subr.bf16.mxu0 0
    %214 = vmatpush1.bf16.msra.mxu0 0
    %215 = vmatprep.subr.bf16.mxu0 0
    %216 = vmatpush1.bf16.msra.mxu0 0
    %217 = vmatprep.subr.bf16.mxu0 0
    %218 = vmatpush1.bf16.msra.mxu0 0
    %219 = vmatprep.subr.bf16.mxu0 0
    %220 = vmatpush1.bf16.msra.mxu0 0
    %221 = vmatprep.subr.bf16.mxu0 0
    %222 = vmatpush1.bf16.msra.mxu0 0
    %223 = vmatprep.mubr.bf16.mxu0 0
    %224 = vmatmul.mubr.bf16.gmra.mrb[0].mxu0 %v189
    %v225 = vpop.f32.mrb[0].mxu0
    %v226 = vadd.f32 %v173, %v225
    %v227 = vpop.f32.mrb[0].mxu0
    %v228 = vpop.f32.mrb[0].mxu0
    %v229 = vpop.f32.mrb[0].mxu0
    %230 = vdwg.mxu0
    %v231 = vmax.f32 %v226, 0.0
    %v232 = vld [vmem:[%s7] sm:$0x1]
    %s233 = sld [smem:[#allocation2]]
    %v234 = vstv %s233
    %v236 = vsel %vm187, %v232, 0
    %v239 = vsel %vm187, %v231, 0
    %241 = vmatprep.subr.mxu0 0.0
    %242 = vmatpush1.xpose.msra.mxu0 %v239
    %243 = vmatprep.subr.mxu0 0.0
    %244 = vmatpush1.xpose.msra.mxu0 0.0
    %245 = vmatprep.subr.mxu0 0.0
    %246 = vmatpush1.xpose.msra.mxu0 0.0
    %247 = vmatprep.subr.mxu0 0.0
    %248 = vmatpush1.xpose.msra.mxu0 0.0
    %249 = vmatprep.subr.mxu0 0.0
    %250 = vmatpush1.xpose.msra.mxu0 0.0
    %251 = vmatprep.subr.mxu0 0.0
    %252 = vmatpush1.xpose.msra.mxu0 0.0
    %253 = vmatprep.subr.mxu0 0.0
    %254 = vmatpush1.xpose.msra.mxu0 0.0
    %255 = vmatprep.subr.mxu0 0.0
    %256 = vmatpush1.xpose.msra.mxu0 0.0
    %257 = vmatprep.subr.mxu0 0.0
    %258 = vmatpush1.xpose.msra.mxu0 0.0
    %259 = vmatprep.subr.mxu0 0.0
    %260 = vmatpush1.xpose.msra.mxu0 0.0
    %261 = vmatprep.subr.mxu0 0.0
    %262 = vmatpush1.xpose.msra.mxu0 0.0
    %263 = vmatprep.subr.mxu0 0.0
    %264 = vmatpush1.xpose.msra.mxu0 0.0
    %265 = vmatprep.subr.mxu0 0.0
    %266 = vmatpush1.xpose.msra.mxu0 0.0
    %267 = vmatprep.subr.mxu0 0.0
    %268 = vmatpush1.xpose.msra.mxu0 0.0
    %269 = vmatprep.subr.mxu0 0.0
    %270 = vmatpush1.xpose.msra.mxu0 0.0
    %271 = vmatprep.subr.mxu0 0.0
    %272 = vmatpush1.xpose.msra.mxu0 0.0
    %273 = vmatprep.subr.mxu0 0.0
    %274 = vmatpush1.xpose.msra.mxu0 0.0
    %275 = vmatprep.subr.mxu0 0.0
    %276 = vmatpush1.xpose.msra.mxu0 0.0
    %277 = vmatprep.subr.mxu0 0.0
    %278 = vmatpush1.xpose.msra.mxu0 0.0
    %279 = vmatprep.subr.mxu0 0.0
    %280 = vmatpush1.xpose.msra.mxu0 0.0
    %281 = vmatprep.subr.mxu0 0.0
    %282 = vmatpush1.xpose.msra.mxu0 0.0
    %283 = vmatprep.subr.mxu0 0.0
    %284 = vmatpush1.xpose.msra.mxu0 0.0
    %285 = vmatprep.subr.mxu0 0.0
    %286 = vmatpush1.xpose.msra.mxu0 0.0
    %287 = vmatprep.subr.mxu0 0.0
    %288 = vmatpush1.xpose.msra.mxu0 0.0
    %289 = vmatprep.subr.mxu0 0.0
    %290 = vmatpush1.xpose.msra.mxu0 0.0
    %291 = vmatprep.subr.mxu0 0.0
    %292 = vmatpush1.xpose.msra.mxu0 0.0
    %293 = vmatprep.subr.mxu0 0.0
    %294 = vmatpush1.xpose.msra.mxu0 0.0
    %295 = vmatprep.subr.mxu0 0.0
    %296 = vmatpush1.xpose.msra.mxu0 0.0
    %297 = vmatprep.subr.mxu0 0.0
    %298 = vmatpush1.xpose.msra.mxu0 0.0
    %299 = vmatprep.subr.mxu0 0.0
    %300 = vmatpush1.xpose.msra.mxu0 0.0
    %301 = vmatprep.subr.mxu0 0.0
    %302 = vmatpush1.xpose.msra.mxu0 0.0
    %303 = vmatprep.subr.mxu0 0.0
    %304 = vmatpush1.xpose.msra.mxu0 0.0
    %305 = vmatprep.mubr.f32.mxu0 0.0
    %306 = vmatmul.mubr.f32.gmra.mrb[0].mxu0 %v236
    %v307 = vpop.f32.mrb[0].mxu0
    %v308 = vadd.f32 %v234, %v307
    %v309 = vpop.f32.mrb[0].mxu0
    %310 = vdwg.mxu0
    %vm311 = vcmask 57344
    %312 = vst.msk [vmem:[#allocation6] sm:$0x1] %vm311, %v308
    // Predicated region
    $region42: #{critic_forward.1} parent=1 // pred_check
      _
    $region43: #{critic_forward.1} parent=1 // pred_check_branch
      %314 = sbr.rel (0) target = $region45
    $region44: #{critic_forward.1} parent=1 // pred_region
      %s316 = ssub.s32 16, 16
      %317 = vsyncadd [#allocation5], %s316
      %s319 = sshll.u32 [#allocation6], 4
      %s320 = int_to_ptr.vmem [resolvable:$true] %s319
      %322 = dma.vmem_to_hbm [thread:$0]  %s320, 16, %s9, [#allocation5]
    $region45: #{critic_forward.1} parent=1 // pred_fallthru
      _
    // Predicated region
    $region46: #{critic_forward.1} parent=1 // pred_check
      _
    $region47: #{critic_forward.1} parent=1 // pred_check_branch
      %324 = sbr.rel (0) target = $region49
    $region48: #{critic_forward.1} parent=1 // pred_region
      %325 = dma.done [#allocation5], 16
    $region49: #{critic_forward.1} parent=1 // pred_fallthru
      _
    %326 = vsyncpa [#allocation4], 1
    %327 = vsyncpa [#allocation5], 1

</llo_original>
